<compile_context>
chip_gen: v7x
topology: tpu7x:2x2x1
jax: 0.10.0
libtpu: 0.0.40
codegen_flags: <defaults>
</compile_context>

<pallas_src>
import math

import jax
import jax.numpy as jnp
from jax import lax
from jax.experimental import pallas as pl
from jax.experimental.pallas import tpu as pltpu


# ----------------------------------------------------------------------------
# Kernel 1: batched input projection (time-parallel, pipelined over row blocks)
# ----------------------------------------------------------------------------
def lstm_proj_kernel(*refs):
    # refs = x_refs (n), w_refs (n), b_ref, out_ref
    n_in = (len(refs) - 2) // 2
    x_refs = refs[:n_in]
    w_refs = refs[n_in:2 * n_in]
    b_ref = refs[2 * n_in]
    out_ref = refs[2 * n_in + 1]

    acc = jnp.dot(x_refs[0][...].astype(w_refs[0].dtype), w_refs[0][...],
                  preferred_element_type=jnp.float32)
    for x_ref, w_ref in zip(x_refs[1:], w_refs[1:]):
        acc = acc + jnp.dot(x_ref[...].astype(w_ref.dtype), w_ref[...],
                            preferred_element_type=jnp.float32)
    # Bias folded once in f32, then stored as bf16 pre-gates (halves HBM traffic).
    out_ref[...] = (acc + b_ref[...]).astype(out_ref.dtype)


def run_input_projection(xs, ws, b, rows, row_block=512, out_dtype=jnp.bfloat16):
    """xs: tuple of (rows, Din_k); ws: matching (Din_k, 8H) bf16; b: (1, 8H) f32."""
    G = ws[0].shape[1]
    # Row block is independent of the recurrence time block: big (amortizes the
    # ~0.35us/grid-step overhead), a multiple of 8 (sublane tiling), capped by
    # the number of rows.  Rows are zero-padded to a whole number of blocks.
    row_block = min(row_block, rows)
    if rows >= 8:
        row_block = max(8, (row_block // 8) * 8)
    n_blocks = pl.cdiv(rows, row_block)
    rows_pad = n_blocks * row_block
    if rows_pad != rows:
        xs = tuple(jnp.pad(x, ((0, rows_pad - rows), (0, 0))) for x in xs)

    # Explicit scoped-VMEM budget sized from the actual double-buffered blocks
    # (capped at v7x's 64 MiB physical VMEM per core).
    vmem = 0
    for x, w in zip(xs, ws):
        vmem += 2 * row_block * x.shape[1] * x.dtype.itemsize   # x block, 2 bufs
        vmem += 2 * w.size * w.dtype.itemsize                   # resident weight
    vmem += b.size * b.dtype.itemsize
    vmem += 2 * row_block * G * jnp.dtype(out_dtype).itemsize   # out block, 2 bufs
    vmem = min(int(vmem * 1.5) + (2 << 20), 64 << 20)

    in_specs = [pl.BlockSpec((row_block, x.shape[1]), lambda i: (i, 0)) for x in xs]
    in_specs += [pl.BlockSpec(w.shape, lambda i: (0, 0)) for w in ws]
    in_specs.append(pl.BlockSpec(b.shape, lambda i: (0, 0)))
    out = pl.pallas_call(
        lstm_proj_kernel,
        out_shape=jax.ShapeDtypeStruct((rows_pad, G), out_dtype),
        grid_spec=pltpu.PrefetchScalarGridSpec(
            num_scalar_prefetch=0,
            grid=(n_blocks,),
            in_specs=in_specs,
            out_specs=pl.BlockSpec((row_block, G), lambda i: (i, 0)),
        ),
        compiler_params=pltpu.CompilerParams(
            dimension_semantics=("parallel",), vmem_limit_bytes=vmem),
    )(*xs, *ws, b)
    return out[:rows] if rows_pad != rows else out


# ----------------------------------------------------------------------------
# Kernel 2: fused fwd+bwd recurrence, streamed over time blocks
# ----------------------------------------------------------------------------
def run_bilstm_recurrence(pre_gates, whh_f, whh_b, hidden_size, seq_len,
                          time_block, out_dtype):
    """pre_gates: (T_pad, B, 8H) bf16 = [fwd 4H | bwd 4H]; whh_*: (H, 4H) bf16."""
    T_pad, B, _ = pre_gates.shape
    H = hidden_size
    tT = time_block
    nT = T_pad // tT
    T_act = seq_len
    needs_mask = (T_act != T_pad)           # static: mask only if time was padded

    def kernel(pgf_ref, pgb_ref, whf_ref, whb_ref,
               yf_ref, yb_ref, hn_ref, cn_ref):
        i = pl.program_id(0)

        @pl.when(i == 0)
        def _init():
            hn_ref[...] = jnp.zeros_like(hn_ref)
            cn_ref[...] = jnp.zeros_like(cn_ref)

        whf = whf_ref[...]                  # hoisted out of the time loop
        whb = whb_ref[...]
        # TODO(synk): hold the recurrent RHS in MXU staging registers across the
        # loop via pltpu.matmul_push_rhs / matmul_acc_lhs / matmul_pop if the
        # bundle dump shows a per-step RHS re-push.

        def gate_math(pre, rec, c):
            g = pre.astype(jnp.float32) + rec            # (B, 4H) f32
            # TODO(synk): pad H to a multiple of 128 for real workloads so these
            # gate slices (and the y stores) are lane-aligned.
            i_g = jax.nn.sigmoid(g[:, 0 * H:1 * H])
            f_g = jax.nn.sigmoid(g[:, 1 * H:2 * H])
            g_g = jnp.tanh(g[:, 2 * H:3 * H])
            o_g = jax.nn.sigmoid(g[:, 3 * H:4 * H])
            c_new = f_g * c + i_g * g_g
            h_new = o_g * jnp.tanh(c_new)
            return h_new, c_new

        def step(s, carry):
            h_f, c_f, h_b, c_b = carry                   # (B, H) f32, live in vregs
            rec_f = jnp.dot(h_f.astype(whf.dtype), whf,
                            preferred_element_type=jnp.float32)
            rec_b = jnp.dot(h_b.astype(whb.dtype), whb,
                            preferred_element_type=jnp.float32)
            h_f_n, c_f_n = gate_math(pgf_ref[s], rec_f, c_f)
            h_b_n, c_b_n = gate_math(pgb_ref[tT - 1 - s], rec_b, c_b)
            if needs_mask:
                valid_f = (i * tT + s) < T_act
                valid_b = ((nT - 1 - i) * tT + (tT - 1 - s)) < T_act
                h_f_n = jnp.where(valid_f, h_f_n, h_f)
                c_f_n = jnp.where(valid_f, c_f_n, c_f)
                h_b_n = jnp.where(valid_b, h_b_n, h_b)
                c_b_n = jnp.where(valid_b, c_b_n, c_b)
            yf_ref[s] = h_f_n.astype(yf_ref.dtype)
            yb_ref[tT - 1 - s] = h_b_n.astype(yb_ref.dtype)
            return h_f_n, c_f_n, h_b_n, c_b_n

        # State carried across time blocks lives in the resident hn/cn output
        # blocks (constant index map) -- no extra VMEM scratch.
        carry0 = (hn_ref[:, :H], cn_ref[:, :H], hn_ref[:, H:], cn_ref[:, H:])
        h_f, c_f, h_b, c_b = lax.fori_loop(0, tT, step, carry0, unroll=True)
        hn_ref[:, :H] = h_f
        hn_ref[:, H:] = h_b
        cn_ref[:, :H] = c_f
        cn_ref[:, H:] = c_b

    out_isz = jnp.dtype(out_dtype).itemsize
    vmem = 0
    vmem += 2 * 2 * tT * B * 4 * H * pre_gates.dtype.itemsize   # 2 pre-gate views, 2 bufs
    vmem += 2 * (whh_f.size + whh_b.size) * whh_f.dtype.itemsize
    vmem += 2 * 2 * tT * B * H * out_isz                        # yf/yb, 2 bufs
    vmem += 2 * B * 2 * H * 4                                   # resident hn/cn (f32)
    vmem = min(int(vmem * 1.5) + (2 << 20), 64 << 20)

    grid_spec = pltpu.PrefetchScalarGridSpec(
        num_scalar_prefetch=0,
        grid=(nT,),
        in_specs=[
            pl.BlockSpec((tT, B, 4 * H), lambda i: (i, 0, 0)),            # fwd half
            pl.BlockSpec((tT, B, 4 * H), lambda i: (nT - 1 - i, 0, 1)),   # bwd half, reversed
            pl.BlockSpec(whh_f.shape, lambda i: (0, 0)),
            pl.BlockSpec(whh_b.shape, lambda i: (0, 0)),
        ],
        out_specs=(
            pl.BlockSpec((tT, B, H), lambda i: (i, 0, 0)),
            pl.BlockSpec((tT, B, H), lambda i: (nT - 1 - i, 0, 0)),
            pl.BlockSpec((B, 2 * H), lambda i: (0, 0)),                   # resident h state
            pl.BlockSpec((B, 2 * H), lambda i: (0, 0)),                   # resident c state
        ),
    )
    return pl.pallas_call(
        kernel,
        out_shape=(
            jax.ShapeDtypeStruct((T_pad, B, H), out_dtype),
            jax.ShapeDtypeStruct((T_pad, B, H), out_dtype),
            jax.ShapeDtypeStruct((B, 2 * H), jnp.float32),
            jax.ShapeDtypeStruct((B, 2 * H), jnp.float32),
        ),
        grid_spec=grid_spec,
        compiler_params=pltpu.CompilerParams(
            dimension_semantics=("arbitrary",), vmem_limit_bytes=vmem),
    )(pre_gates, pre_gates, whh_f, whh_b)


# ----------------------------------------------------------------------------
# LstmEncoder forward (bidirectional, multi-layer, batch_first)
# ----------------------------------------------------------------------------
def lstm_encoder_forward(token_embeddings, params, num_layers, hidden_size,
                         encoder_mask=None, initial_state=None,
                         time_block=64, proj_row_block=512,
                         act_dtype=jnp.bfloat16):
    # encoder_mask is ignored, matching the reference module (plain nn.LSTM call,
    # no pack_padded_sequence).
    del encoder_mask
    # TODO(synk): non-zero initial_state is not plumbed into the kernel; zero
    # initial (h, c) matches the nn.LSTM default when initial_state=None.
    del initial_state
    # TODO(synk): on v7x the two directions should be sharded across the two
    # TensorCores (pl.core_map / create_tensorcore_mesh); fused single-core is
    # the right call on v5e/v6e.

    B, T, _ = token_embeddings.shape
    H = hidden_size
    bt = max(1, min(time_block, T))
    T_pad = bt * pl.cdiv(T, bt)              # pad T to a whole number of blocks

    x_tbd = jnp.transpose(token_embeddings, (1, 0, 2))          # (T, B, D)
    if T_pad != T:
        x_tbd = jnp.pad(x_tbd, ((0, T_pad - T), (0, 0), (0, 0)))
    xs = (x_tbd.astype(act_dtype).reshape(T_pad * B, -1),)      # bf16 time-major rows

    h_list, c_list = [], []
    y_f = y_b = None
    for l, (ws, b_proj, whh_f, whh_b) in enumerate(params):
        pre_gates = run_input_projection(xs, ws, b_proj, T_pad * B,
                                         row_block=proj_row_block)
        pre_gates = pre_gates.reshape(T_pad, B, 8 * H)
        is_last = (l == num_layers - 1)
        out_dtype = jnp.float32 if is_last else act_dtype
        y_f, y_b, h_n_l, c_n_l = run_bilstm_recurrence(
            pre_gates, whh_f, whh_b, H, T, bt, out_dtype)
        h_list.append(h_n_l)
        c_list.append(c_n_l)
        if not is_last:
            xs = (y_f.reshape(T_pad * B, H), y_b.reshape(T_pad * B, H))
        # TODO(synk): inter-layer dropout (cfg.dropout) is training-only; omitted.

    out_tb = jnp.concatenate([y_f[:T], y_b[:T]], axis=-1)       # (T, B, 2H)
    output = jnp.transpose(out_tb, (1, 0, 2))                   # (B, T, 2H)
    h_n = jnp.stack(h_list, axis=1)                             # (B, L, 2H) = [h_fwd | h_bwd]
    c_n = jnp.stack(c_list, axis=1)
    return {'encoder_out': output, 'hidden_state': (h_n, c_n)}


# ----------------------------------------------------------------------------
# Deterministic parameter construction (nn.LSTM shapes/init) + packing
# ----------------------------------------------------------------------------
def init_lstm_params(key, input_embed_dim, hidden_size, num_layers,
                     matmul_dtype=jnp.bfloat16):
    H = hidden_size
    bound = 1.0 / math.sqrt(H)
    packed, raw = [], []
    for l in range(num_layers):
        din = input_embed_dim if l == 0 else 2 * H
        dirs = []
        for _direction in range(2):           # 0 = forward, 1 = backward
            key, k1, k2, k3, k4 = jax.random.split(key, 5)
            w_ih = jax.random.uniform(k1, (4 * H, din), jnp.float32, -bound, bound)
            w_hh = jax.random.uniform(k2, (4 * H, H), jnp.float32, -bound, bound)
            b_ih = jax.random.uniform(k3, (4 * H,), jnp.float32, -bound, bound)
            b_hh = jax.random.uniform(k4, (4 * H,), jnp.float32, -bound, bound)
            dirs.append((w_ih, w_hh, b_ih + b_hh))
        raw.append(tuple(dirs))

        (w_ih_f, w_hh_f, b_f), (w_ih_b, w_hh_b, b_b) = dirs
        # Input projection weights: (din, 8H) = [W_ih_f^T | W_ih_b^T], gates [i,f,g,o].
        w_proj = jnp.concatenate([w_ih_f.T, w_ih_b.T], axis=1).astype(matmul_dtype)
        b_proj = jnp.concatenate([b_f, b_b]).reshape(1, 8 * H).astype(jnp.float32)
        # Dense per-direction recurrent weights (H, 4H) -- no zero-padded block-diag.
        whh_f = w_hh_f.T.astype(matmul_dtype)
        whh_b = w_hh_b.T.astype(matmul_dtype)
        if l == 0:
            ws = (w_proj,)
        else:
            # layer >= 1 input is [y_fwd | y_bwd]; each projection input gets its
            # own weight slab (no host-side concatenate needed).
            ws = (w_proj[:H], w_proj[H:])
        packed.append((ws, b_proj, whh_f, whh_b))
    return packed, raw


# ----------------------------------------------------------------------------
# Pure-JAX reference (mirrors the kernel's bf16 rounding) for validation
# ----------------------------------------------------------------------------
def lstm_encoder_reference(token_embeddings, raw_params, num_layers, hidden_size,
                           matmul_dtype=jnp.bfloat16, act_dtype=jnp.bfloat16,
                           pregate_dtype=jnp.bfloat16):
    def rnd(a, dt):
        return a.astype(dt).astype(jnp.float32)

    H = hidden_size
    B, T, _ = token_embeddings.shape
    layer_in = token_embeddings.astype(jnp.float32)
    h_list, c_list = [], []
    layer_out = None
    for l in range(num_layers):
        layer_in_r = rnd(layer_in, matmul_dtype)
        outs, hs, cs = [], [], []
        for d, (w_ih, w_hh, b) in enumerate(raw_params[l]):
            w_ih_r = rnd(w_ih, matmul_dtype)
            w_hh_r = rnd(w_hh, matmul_dtype)
            xs_seq = layer_in_r if d == 0 else layer_in_r[:, ::-1]
            # Mirror the kernel: pre-gates (x @ W_ih^T + b) are stored in bf16.
            pre = rnd(jnp.einsum('btd,gd->btg', xs_seq, w_ih_r) + b, pregate_dtype)

            def step(carry, pre_t, w_hh_r=w_hh_r):
                h, c = carry
                g = pre_t + rnd(h, matmul_dtype) @ w_hh_r.T
                i = jax.nn.sigmoid(g[:, :H])
                f = jax.nn.sigmoid(g[:, H:2 * H])
                gg = jnp.tanh(g[:, 2 * H:3 * H])
                o = jax.nn.sigmoid(g[:, 3 * H:])
                c = f * c + i * gg
                h = o * jnp.tanh(c)
                return (h, c), h

            init = (jnp.zeros((B, H), jnp.float32), jnp.zeros((B, H), jnp.float32))
            (h_fin, c_fin), ys = lax.scan(step, init, jnp.transpose(pre, (1, 0, 2)))
            ys = jnp.transpose(ys, (1, 0, 2))
            if d == 1:
                ys = ys[:, ::-1]
            outs.append(ys)
            hs.append(h_fin)
            cs.append(c_fin)
        layer_out = jnp.concatenate(outs, axis=-1)
        h_list.append(jnp.concatenate(hs, axis=-1))
        c_list.append(jnp.concatenate(cs, axis=-1))
        layer_in = rnd(layer_out, act_dtype) if l < num_layers - 1 else layer_out
    return layer_out, jnp.stack(h_list, 1), jnp.stack(c_list, 1)


if __name__ == "__main__":
    B, T, D = 2, 20, 16       # batch, seq (deliberately NOT a time-block multiple), input dim
    H, num_layers = 32, 2     # cfg.hidden_size, cfg.num_layers

    key = jax.random.PRNGKey(0)
    key, xk = jax.random.split(key)
    token_embeddings = jax.random.normal(xk, (B, T, D), jnp.float32)
    params, raw_params = init_lstm_params(key, D, H, num_layers)

    # Small blocks here exercise the multi-block grid + time/row padding paths;
    # real workloads should use the defaults (time_block=64, proj_row_block=512).
    out = lstm_encoder_forward(token_embeddings, params, num_layers, H,
                               time_block=8, proj_row_block=32)
    enc = jax.block_until_ready(out['encoder_out'])
    h_n, c_n = out['hidden_state']
    h_n = jax.block_until_ready(h_n)
    c_n = jax.block_until_ready(c_n)

    assert enc.shape == (B, T, 2 * H)
    assert h_n.shape == (B, num_layers, 2 * H)
    assert c_n.shape == (B, num_layers, 2 * H)

    ref_out, ref_h, ref_c = lstm_encoder_reference(
        token_embeddings, raw_params, num_layers, H)
    tol = 2e-2
    assert float(jnp.max(jnp.abs(enc - ref_out))) < tol, "encoder_out mismatch"
    assert float(jnp.max(jnp.abs(h_n - ref_h))) < tol, "h_n mismatch"
    assert float(jnp.max(jnp.abs(c_n - ref_c))) < tol, "c_n mismatch"
    print("KERNEL_OK")
</pallas_src>

<mosaic_0001>
module attributes {stable_mosaic.version = 11 : i64} {
  func.func @lstm_proj_kernel(%arg0: i32, %arg1: memref<32x16xbf16, #tpu.memory_space<vmem>>, %arg2: memref<16x256xbf16, #tpu.memory_space<vmem>>, %arg3: memref<1x256xf32, #tpu.memory_space<vmem>>, %arg4: memref<32x256xbf16, #tpu.memory_space<vmem>>) attributes {dimension_semantics = [#tpu.dimension_semantics<parallel>], iteration_bounds = array<i64: 2>, scalar_prefetch = 0 : i64, scratch_operands = 0 : i64, tpu.core_type = #tpu.core_type<tc>, window_params = [{transform_indices = @transform_0, window_bounds = array<i64: 32, 16>}, {pipeline_mode = #tpu.pipeline_mode<synchronous>, transform_indices = @transform_1, window_bounds = array<i64: 16, 256>}, {pipeline_mode = #tpu.pipeline_mode<synchronous>, transform_indices = @transform_2, window_bounds = array<i64: 1, 256>}, {transform_indices = @transform_3, window_bounds = array<i64: 32, 256>}]} {
    %c0 = arith.constant 0 : index
    %c0_0 = arith.constant 0 : index
    %0 = vector.load %arg1[%c0, %c0_0] : memref<32x16xbf16, #tpu.memory_space<vmem>>, vector<32x16xbf16>
    %c0_1 = arith.constant 0 : index
    %c0_2 = arith.constant 0 : index
    %1 = vector.load %arg2[%c0_1, %c0_2] : memref<16x256xbf16, #tpu.memory_space<vmem>>, vector<16x256xbf16>
    %cst = arith.constant dense<0.000000e+00> : vector<32x256xf32>
    %2 = tpu.matmul %0, %1, %cst {dimension_numbers = #tpu.dot_dimension_numbers<[1], [0], [0], [1], [0, 0, 1, 1], [], []>} : vector<32x16xbf16>, vector<16x256xbf16>, vector<32x256xf32> -> vector<32x256xf32>
    %c0_3 = arith.constant 0 : index
    %c0_4 = arith.constant 0 : index
    %3 = vector.load %arg3[%c0_3, %c0_4] : memref<1x256xf32, #tpu.memory_space<vmem>>, vector<1x256xf32>
    %4 = vector.broadcast %3 : vector<1x256xf32> to vector<32x256xf32>
    %5 = arith.addf %2, %4 : vector<32x256xf32>
    %6 = arith.truncf %5 : vector<32x256xf32> to vector<32x256xbf16>
    %c0_5 = arith.constant 0 : index
    %c0_6 = arith.constant 0 : index
    %7 = vector.load %arg4[%c0_5, %c0_6] : memref<32x256xbf16, #tpu.memory_space<vmem>>, vector<32x256xbf16>
    tpu.vector_store %arg4[%c0_5, %c0_6], %6 {strides = array<i32>} : memref<32x256xbf16, #tpu.memory_space<vmem>>, vector<32x256xbf16>,
    return
  }
  func.func @transform_0(%arg0: i32) -> (i32, i32) {
    %c0_i32 = arith.constant 0 : i32
    %c0_i32_0 = arith.constant 0 : i32
    return %arg0, %c0_i32 : i32, i32
  }
  func.func @transform_1(%arg0: i32) -> (i32, i32) {
    %c0_i32 = arith.constant 0 : i32
    %c0_i32_0 = arith.constant 0 : i32
    %c0_i32_1 = arith.constant 0 : i32
    return %c0_i32, %c0_i32_0 : i32, i32
  }
  func.func @transform_2(%arg0: i32) -> (i32, i32) {
    %c0_i32 = arith.constant 0 : i32
    %c0_i32_0 = arith.constant 0 : i32
    %c0_i32_1 = arith.constant 0 : i32
    return %c0_i32, %c0_i32_0 : i32, i32
  }
  func.func @transform_3(%arg0: i32) -> (i32, i32) {
    %c0_i32 = arith.constant 0 : i32
    %c0_i32_0 = arith.constant 0 : i32
    return %arg0, %c0_i32 : i32, i32
  }
}

</mosaic_0001>

<llo_original>
// kernel: tpu_custom_call.1
$region0: #{tpu_custom_call.1}
  #allocation0 [shape = 'u32[]', space=smem, size = 0x4, offset = 0x4, fixed_abs, tag = 'smem constant byte address 0x4 - core index']
  #allocation1 [shape = 'u32[144,128]{1,0:T(1,128)}', space=vmem, size = 0x12000, scoped, tag = 'internal scratch']
  %s0 = inlined_call_operand.vmem [shape: bf16[64,16], index: 0, kind: input, shape index: {}]
  %s1 = inlined_call_operand.vmem [shape: bf16[16,256], index: 1, kind: input, shape index: {}]
  %s2 = inlined_call_operand.vmem [shape: f32[1,256], index: 2, kind: input, shape index: {}]
  %s3 = inlined_call_operand.hbm [shape: bf16[64,256], index: 3, kind: output, shape index: {}]
  %s4 = sld [smem:[#allocation0]]
  $region45: #{tpu_custom_call.1} parent=0
    _
  %s6 = ssub.s32 1, %s4
  %s7 = scalar_select 0, %s6, %s4
  $region1: #{tpu_custom_call.1} parent=0
    #allocation2 [shape = 'u8[32768]{0}', space=vmem, size = 0x8000, scoped, tag = 'output window, operand 0']
    #allocation3 [shape = 's32[2]{0}', space=sflag, size = 0x8, scoped, tag = 'scoped memory for tpu_custom_call.1']
    %8 = vsyncpa [#allocation3], 0
    %s9 = scalar_lea.sflag [#allocation3], 1
    %10 = vsyncpa %s9, 0
    loop: start=0, step=1, limit=4
    $region2: #{tpu_custom_call.1} parent=1 // loop_pre_header
      _
    $region3: #{tpu_custom_call.1} parent=1 // loop_header
      %s12 = sphi 0, %s16
      %p13 = scmp.ge.s32.totalorder %s12, 4
      %s22 = sphi 0, %s24
      %s25 = sphi 0, %s22
      %s26 = sphi 0, %s25
      %s42 = sphi 0, %s26
      %s46 = sphi 0, %s46
      %s48 = sphi 0, %s46
      %s49 = sphi 0, %s48
      %s63 = sphi 0, %s49
      %s67 = sphi 0, %s67
      %s69 = sphi 0, %s67
      %s70 = sphi 0, %s69
      %s84 = sphi 0, %s70
      %s90 = sphi 0, %s92
      %s93 = sphi 0, %s90
      %s94 = sphi 0, %s93
      %s110 = sphi 0, %s94
    $region4: #{tpu_custom_call.1} parent=1 // loop_header_branch
      %15 = sbr.rel (%p13) target = $region8
    $region5: #{tpu_custom_call.1} parent=1 // loop_body
      %s17 = ssub.s32 %s12, 1
      %s18 = ssub.s32 %s12, 2
      %s19 = sadd.s32 %s12, 1
      %s20 = ssub.s32 %s12, %s19
      %p21 = scmp.eq.s32.totalorder %s20, 0
      %s23 = sadd.s32 %s22, 1
      %s24 = scalar_select %p21, %s22, %s23
      %p27 = pneg %p21
      %p28 = scmp.eq.s32.totalorder %s12, 1
      %p29 = por %p27, %p28
      %p30 = scmp.ne.s32.totalorder %s22, %s25
      %p31 = scmp.eq.s32.totalorder %s12, 0
      %p32 = por %p30, %p31
      %p33 = scmp.ne.s32.totalorder %s22, %s25
      %p34 = scmp.eq.s32.totalorder %s17, 1
      %p35 = por %p33, %p34
      %p36 = scmp.ne.s32.totalorder %s25, %s26
      %p37 = scmp.eq.s32.totalorder %s17, 0
      %p38 = por %p36, %p37
      %p39 = scmp.ne.s32.totalorder %s25, %s26
      %p40 = scmp.eq.s32.totalorder %s18, 1
      %p41 = por %p39, %p40
      %p43 = scmp.ne.s32.totalorder %s26, %s42
      %p44 = scmp.eq.s32.totalorder %s18, 0
      %p45 = por %p43, %p44
      %s47 = sadd.s32 %s46, 1
      %p50 = scmp.eq.s32.totalorder %s12, 1
      %p51 = scmp.ne.s32.totalorder %s46, %s48
      %p52 = scmp.eq.s32.totalorder %s12, 0
      %p53 = por %p51, %p52
      %p54 = scmp.ne.s32.totalorder %s46, %s48
      %p55 = scmp.eq.s32.totalorder %s17, 1
      %p56 = por %p54, %p55
      %p57 = scmp.ne.s32.totalorder %s48, %s49
      %p58 = scmp.eq.s32.totalorder %s17, 0
      %p59 = por %p57, %p58
      %p60 = scmp.ne.s32.totalorder %s48, %s49
      %p61 = scmp.eq.s32.totalorder %s18, 1
      %p62 = por %p60, %p61
      %p64 = scmp.ne.s32.totalorder %s49, %s63
      %p65 = scmp.eq.s32.totalorder %s18, 0
      %p66 = por %p64, %p65
      %s68 = sadd.s32 %s67, 1
      %p71 = scmp.eq.s32.totalorder %s12, 1
      %p72 = scmp.ne.s32.totalorder %s67, %s69
      %p73 = scmp.eq.s32.totalorder %s12, 0
      %p74 = por %p72, %p73
      %p75 = scmp.ne.s32.totalorder %s67, %s69
      %p76 = scmp.eq.s32.totalorder %s17, 1
      %p77 = por %p75, %p76
      %p78 = scmp.ne.s32.totalorder %s69, %s70
      %p79 = scmp.eq.s32.totalorder %s17, 0
      %p80 = por %p78, %p79
      %p81 = scmp.ne.s32.totalorder %s69, %s70
      %p82 = scmp.eq.s32.totalorder %s18, 1
      %p83 = por %p81, %p82
      %p85 = scmp.ne.s32.totalorder %s70, %s84
      %p86 = scmp.eq.s32.totalorder %s18, 0
      %p87 = por %p85, %p86
      %s88 = ssub.s32 %s12, %s19
      %p89 = scmp.eq.s32.totalorder %s88, 0
      %s91 = sadd.s32 %s90, 1
      %s92 = scalar_select %p89, %s90, %s91
      %p95 = pneg %p89
      %p96 = scmp.eq.s32.totalorder %s12, 1
      %p97 = por %p95, %p96
      %p98 = scmp.ne.s32.totalorder %s90, %s93
      %p99 = scmp.eq.s32.totalorder %s12, 0
      %p100 = por %p98, %p99
      %p101 = scmp.ne.s32.totalorder %s90, %s93
      %p102 = scmp.eq.s32.totalorder %s17, 1
      %p103 = por %p101, %p102
      %p104 = scmp.ne.s32.totalorder %s93, %s94
      %p105 = scmp.eq.s32.totalorder %s17, 0
      %p106 = por %p104, %p105
      %p107 = scmp.ne.s32.totalorder %s93, %s94
      %p108 = scmp.eq.s32.totalorder %s18, 1
      %p109 = por %p107, %p108
      %p111 = scmp.ne.s32.totalorder %s94, %s110
      %p112 = scmp.eq.s32.totalorder %s18, 0
      %p113 = por %p111, %p112
      %p114 = scmp.le.s32.totalorder 1, %s12
      %p115 = scmp.lt.s32.totalorder %s12, 3
      %p116 = pnand %p114, %p115
      %p117 = pneg %p116
      // Predicated region
      $region9: #{tpu_custom_call.1} parent=5 // pred_check
        _
      $region10: #{tpu_custom_call.1} parent=5 // pred_check_branch
        %119 = sbr.rel (%p116) target = $region12
      $region11: #{tpu_custom_call.1} parent=5 // pred_region
        %s120 = ssub.s32 %s12, 1
        // Predicated region
        $region13: #{tpu_custom_call.1} parent=11 // pred_check
          %p121 = pneg %p59
        $region14: #{tpu_custom_call.1} parent=11 // pred_check_branch
          %123 = sbr.rel (%p121) target = $region16
        $region15: #{tpu_custom_call.1} parent=11 // pred_region
          _
        $region16: #{tpu_custom_call.1} parent=11 // pred_fallthru
          _
        // Predicated region
        $region17: #{tpu_custom_call.1} parent=11 // pred_check
          %p124 = pneg %p80
        $region18: #{tpu_custom_call.1} parent=11 // pred_check_branch
          %126 = sbr.rel (%p124) target = $region20
        $region19: #{tpu_custom_call.1} parent=11 // pred_region
          _
        $region20: #{tpu_custom_call.1} parent=11 // pred_fallthru
          _
      $region12: #{tpu_custom_call.1} parent=5 // pred_fallthru
        _
      %p127 = scmp.lt.s32.totalorder %s12, 2
      // Predicated region
      $region21: #{tpu_custom_call.1} parent=5 // pred_check
        %p128 = pneg %p127
      $region22: #{tpu_custom_call.1} parent=5 // pred_check_branch
        %130 = sbr.rel (%p128) target = $region24
      $region23: #{tpu_custom_call.1} parent=5 // pred_region
        // Predicated region
        $region25: #{tpu_custom_call.1} parent=23 // pred_check
          %p131 = pneg %p32
        $region26: #{tpu_custom_call.1} parent=23 // pred_check_branch
          %133 = sbr.rel (%p131) target = $region28
        $region27: #{tpu_custom_call.1} parent=23 // pred_region
          %s134 = smul.u32 4, %s12
          %p135 = scmp.lt.s32.totalorder %s134, 7
          %s136 = scalar_select %p135, %s134, 7
          %s137 = smul.addr %s136, 4
          %s138 = scalar_lea.vmem %s0, %s137
          %s139 = smul.u32 4, %s12
        $region28: #{tpu_custom_call.1} parent=23 // pred_fallthru
          _
      $region24: #{tpu_custom_call.1} parent=5 // pred_fallthru
        _
      %p140 = scmp.le.s32.totalorder 1, %s12
      %p141 = scmp.lt.s32.totalorder %s12, 3
      %p142 = pnand %p140, %p141
      %p143 = pneg %p142
      // Predicated region
      $region29: #{tpu_custom_call.1} parent=5 // pred_check
        _
      $region30: #{tpu_custom_call.1} parent=5 // pred_check_branch
        %145 = sbr.rel (%p142) target = $region32
      $region31: #{tpu_custom_call.1} parent=5 // pred_region
        %s146 = ssub.s32 %s12, 1
        %s147 = smul.u32 4, %s17
        %p148 = scmp.lt.s32.totalorder %s147, 7
        %s149 = scalar_select %p148, %s147, 7
        %s150 = smul.addr %s149, 4
        %s151 = scalar_lea.vmem %s0, %s150
        %p152 = pneg %p38
        %p153 = pneg %p35
        %p154 = pneg %p59
        %p155 = pneg %p56
        %p156 = pneg %p80
        %p157 = pneg %p77
        %p158 = pneg %p106
        %p159 = pneg %p103
        %s160 = sand.u32 %s93, 1
        %s161 = scalar_lea.sflag [#allocation3], %s160
        %s162 = sand.u32 %s93, 1
        %s163 = smul.addr %s162, 32
        %s164 = scalar_lea.vmem [#allocation2], %s163
        %s165 = smul.u32 4, %s17
        %p166 = scmp.lt.s32.totalorder %s165, 7
        %s167 = scalar_select %p166, %s165, 7
        %s168 = smul.addr %s167, 4
        %s169 = scalar_lea.vmem %s0, %s168
        %s170 = smul.u32 4, %s17
        %s171 = smul.u32 4, %s17
        %v173 = vld [vmem:[%s169] sm:$0xf]
        %v174 = vld [vmem:[%s169 + $0x4] sm:$0xf]
        %v175 = vld [vmem:[%s169 + $0x8] sm:$0xf]
        %v176 = vld [vmem:[%s169 + $0xc] sm:$0xf]
        %v177 = vld [vmem:[%s1] sm:$0xff]
        %v178 = vld [vmem:[%s1 + $0x8] sm:$0xff]
        %v179 = vld [vmem:[%s2] sm:$0x3]
        %v181 = vlaneseq
        %v182 = vshrl.u32 %v181, 7
        %v183 = vsub.s32 0, %v182
        %v184 = vrot.slane %v179, %v183
        %v185 = vlaneseq
        %v186 = vshrl.u32 %v185, 7
        %v187 = vsub.s32 1, %v186
        %v188 = vrot.slane %v179, %v187
        %v195 = vunpack.c.l.b16 %v173
        %v196 = vunpack.c.l.b16 %v174
        %v197 = vunpack.c.l.b16 %v175
        %v198 = vunpack.c.l.b16 %v176
        %v199 = vpack.c.b16 %v196, %v195
        %v200 = vpack.c.b16 %v198, %v197
        %v203 = vunpack.c.l.b16 %v177
        %v204 = vunpack.c.h.b16 %v177
        %v205 = vunpack.c.l.b16 %v178
        %v206 = vunpack.c.h.b16 %v178
        %v207 = vpack.c.b16 %v205, %v203
        %v208 = vpack.c.b16 %v206, %v204
        %vm211 = vcmask 130048
        %v213 = vsel %vm211, %v199, 0
        %v216 = vsel %vm211, %v200, 0
        %218 = vmatprep.subr.bf16.mxu0 %v208
        %219 = vmatpush1.bf16.msra.mxu0 %v207
        %220 = vmatprep.subr.bf16.mxu0 0
        %221 = vmatpush1.bf16.msra.mxu0 0
        %222 = vmatprep.subr.bf16.mxu0 0
        %223 = vmatpush1.bf16.msra.mxu0 0
        %224 = vmatprep.subr.bf16.mxu0 0
        %225 = vmatpush1.bf16.msra.mxu0 0
        %226 = vmatprep.subr.bf16.mxu0 0
        %227 = vmatpush1.bf16.msra.mxu0 0
        %228 = vmatprep.subr.bf16.mxu0 0
        %229 = vmatpush1.bf16.msra.mxu0 0
        %230 = vmatprep.subr.bf16.mxu0 0
        %231 = vmatpush1.bf16.msra.mxu0 0
        %232 = vmatprep.subr.bf16.mxu0 0
        %233 = vmatpush1.bf16.msra.mxu0 0
        %234 = vmatprep.subr.bf16.mxu0 0
        %235 = vmatpush1.bf16.msra.mxu0 0
        %236 = vmatprep.subr.bf16.mxu0 0
        %237 = vmatpush1.bf16.msra.mxu0 0
        %238 = vmatprep.subr.bf16.mxu0 0
        %239 = vmatpush1.bf16.msra.mxu0 0
        %240 = vmatprep.subr.bf16.mxu0 0
        %241 = vmatpush1.bf16.msra.mxu0 0
        %242 = vmatprep.subr.bf16.mxu0 0
        %243 = vmatpush1.bf16.msra.mxu0 0
        %244 = vmatprep.subr.bf16.mxu0 0
        %245 = vmatpush1.bf16.msra.mxu0 0
        %246 = vmatprep.subr.bf16.mxu0 0
        %247 = vmatpush1.bf16.msra.mxu0 0
        %248 = vmatprep.subr.bf16.mxu0 0
        %249 = vmatpush1.bf16.msra.mxu0 0
        %250 = vmatprep.mubr.bf16.mxu0 0
        %251 = vmatmul.mubr.bf16.gmra.mrb[0].mxu0 %v213
        %v252 = vpop.f32.mrb[0].mxu0
        %v253 = vadd.f32 %v184, %v252
        %v254 = vpop.f32.mrb[0].mxu0
        %v255 = vadd.f32 %v188, %v254
        %v256 = vpop.f32.mrb[0].mxu0
        %v257 = vadd.f32 %v184, %v256
        %v258 = vpop.f32.mrb[0].mxu0
        %v259 = vadd.f32 %v188, %v258
        %260 = vmatprep.mubr.bf16.mxu0 0
        %261 = vmatmul.mubr.bf16.gmra.mrb[0].mxu0 %v216
        %v262 = vpop.f32.mrb[0].mxu0
        %v263 = vadd.f32 %v184, %v262
        %v264 = vpop.f32.mrb[0].mxu0
        %v265 = vadd.f32 %v188, %v264
        %v266 = vpop.f32.mrb[0].mxu0
        %v267 = vadd.f32 %v184, %v266
        %v268 = vpop.f32.mrb[0].mxu0
        %v269 = vadd.f32 %v188, %v268
        %270 = vdwg.mxu0
        %v271 = vpack.c.bf16 %v257, %v253
        %v272 = vpack.c.bf16 %v259, %v255
        %v273 = vpack.c.bf16 %v267, %v263
        %v274 = vpack.c.bf16 %v269, %v265
        %v279 = vunpack.c.l.b16 %v271
        %v280 = vunpack.c.l.b16 %v272
        %v281 = vunpack.c.h.b16 %v271
        %v282 = vunpack.c.h.b16 %v272
        %v283 = vunpack.c.l.b16 %v273
        %v284 = vunpack.c.l.b16 %v274
        %v285 = vunpack.c.h.b16 %v273
        %v286 = vunpack.c.h.b16 %v274
        %v287 = vpack.c.b16 %v280, %v279
        %v288 = vpack.c.b16 %v282, %v281
        %v289 = vpack.c.b16 %v284, %v283
        %v290 = vpack.c.b16 %v286, %v285
        %295 = vst [vmem:[%s164] sm:$0xff] %v287
        %296 = vst [vmem:[%s164 + $0x8] sm:$0xff] %v288
        %297 = vst [vmem:[%s164 + $0x10] sm:$0xff] %v289
        %298 = vst [vmem:[%s164 + $0x18] sm:$0xff] %v290
        %s299 = sand.u32 %s93, 1
        %s300 = scalar_lea.sflag [#allocation3], %s299
        %s301 = sand.u32 %s93, 1
        %s302 = smul.addr %s301, 32
        %s303 = scalar_lea.vmem [#allocation2], %s302
        // Predicated region
        $region33: #{tpu_custom_call.1} parent=31 // pred_check
          %p304 = pneg %p103
        $region34: #{tpu_custom_call.1} parent=31 // pred_check_branch
          %306 = sbr.rel (%p304) target = $region36
        $region35: #{tpu_custom_call.1} parent=31 // pred_region
          %s307 = smul.u32 4, %s17
          %s309 = ssub.s32 512, 512
          %310 = vsyncadd %s300, %s309
          %s311 = smul.addr %s307, 2
          %s312 = smul.addr %s311, 64
          %s313 = scalar_lea.hbm %s3, %s312
          %s314 = sshll.u32 %s303, 4
          %s315 = int_to_ptr.vmem [resolvable:$true] %s314
          %320 = dma.vmem_to_hbm [thread:$0]  %s315, 512, %s313, %s300, 128, 128, 8
        $region36: #{tpu_custom_call.1} parent=31 // pred_fallthru
          _
      $region32: #{tpu_custom_call.1} parent=5 // pred_fallthru
        _
      %p321 = scmp.le.s32.totalorder 2, %s12
      // Predicated region
      $region37: #{tpu_custom_call.1} parent=5 // pred_check
        %p322 = pneg %p321
      $region38: #{tpu_custom_call.1} parent=5 // pred_check_branch
        %324 = sbr.rel (%p322) target = $region40
      $region39: #{tpu_custom_call.1} parent=5 // pred_region
        %s325 = ssub.s32 %s12, 2
        // Predicated region
        $region41: #{tpu_custom_call.1} parent=39 // pred_check
          %p326 = pneg %p109
        $region42: #{tpu_custom_call.1} parent=39 // pred_check_branch
          %328 = sbr.rel (%p326) target = $region44
        $region43: #{tpu_custom_call.1} parent=39 // pred_region
          %s329 = sand.u32 %s94, 1
          %s330 = scalar_lea.sflag [#allocation3], %s329
          %s331 = sand.u32 %s94, 1
          %s332 = smul.addr %s331, 32
          %s333 = scalar_lea.vmem [#allocation2], %s332
          %334 = dma.done %s330, 512
        $region44: #{tpu_custom_call.1} parent=39 // pred_fallthru
          _
      $region40: #{tpu_custom_call.1} parent=5 // pred_fallthru
        _
    $region6: #{tpu_custom_call.1} parent=1 // loop_footer
      %s16 = sadd.s32 1, %s12
    $region7: #{tpu_custom_call.1} parent=1 // loop_footer_branch
      %11 = sbr.rel target = $region3
    $region8: #{tpu_custom_call.1} parent=1 // loop_exit
      _
    %335 = vsyncpa [#allocation3], 1
    %s336 = scalar_lea.sflag [#allocation3], 1
    %337 = vsyncpa %s336, 1

</llo_original>
